<compile_context>
chip_gen: v7x
topology: tpu7x:2x2x1
jax: 0.10.0
libtpu: 0.0.40
codegen_flags: <defaults>
</compile_context>

<pallas_src>
import jax
import jax.numpy as jnp
import numpy as np
from jax.experimental import pallas as pl
from jax.experimental.pallas import tpu as pltpu

SEED = 30
TAU = 0.02

# Upper bound on packed rows per grid step; the actual tile is further capped
# by the chip's VMEM capacity and balanced across the grid.
MAX_TILE_ROWS = 16384


def _round_up(x, m):
    return ((x + m - 1) // m) * m


def _vmem_capacity_bytes():
    """Physical VMEM per core; conservative fallback fits every generation."""
    try:
        info = pltpu.get_tpu_info()
        cap = getattr(info, "vmem_capacity_bytes", None)
        if cap:
            return int(cap)
    except Exception:
        pass
    return 64 * 1024 * 1024  # v7x-sized fallback (safe on v5e/v6e too)


def _pack_params(n):
    """pack logical rows per 128-lane vreg row; each output block padded to n_pad."""
    if n >= 128:
        pack = 1
        n_pad = _round_up(n, 128)
    else:
        pack = 128 // n          # floor: handles n that do not divide 128
        n_pad = 128 // pack      # output block width (>= n): 128-lane-dense stores
    return pack, n_pad


def build_fused_weights(A, B, tau=TAU):
    """W_s = blockdiag(I + tau*A.T | 0-pad), W_a = blockdiag(B.T | 0-pad).

    Built once outside the per-step call path (A, B are static per step).
    Returns (W_s, W_a, pack, n_pad) with
      W_s: (pack*n, pack*n_pad), W_a: (pack*d, pack*n_pad).
    """
    n = A.shape[0]
    d = B.shape[1]
    pack, n_pad = _pack_params(n)

    ws = jnp.eye(n, dtype=jnp.float32) + tau * A.T.astype(jnp.float32)   # (n, n)
    wa = B.T.astype(jnp.float32)                                         # (d, n)
    if n_pad != n:
        ws = jnp.pad(ws, ((0, 0), (0, n_pad - n)))
        wa = jnp.pad(wa, ((0, 0), (0, n_pad - n)))
    if pack > 1:
        eye = jnp.eye(pack, dtype=jnp.float32)
        ws = jnp.kron(eye, ws)       # (pack*n, pack*n_pad), block diagonal
        wa = jnp.kron(eye, wa)       # (pack*d, pack*n_pad), block diagonal
    return ws, wa, pack, n_pad


# ---------------------------------------------------------------------------
# Pallas kernel: out = S @ W_s + A @ W_a   (two MXU matmuls, no epilogue)
# ---------------------------------------------------------------------------
def _koopman_kernel(s_ref, a_ref, ws_ref, wa_ref, o_ref):
    o_ref[...] = (
        jnp.dot(s_ref[...], ws_ref[...], preferred_element_type=jnp.float32)
        + jnp.dot(a_ref[...], wa_ref[...], preferred_element_type=jnp.float32)
    )


def _choose_tiles(rows_needed, bytes_per_row, vmem_cap):
    """Balanced tiles capped by VMEM; >= 2 grid steps when there is enough work."""
    budget = vmem_cap // 2                                   # headroom for scratch
    by_vmem = max(8, (budget // (2 * bytes_per_row)) // 8 * 8)
    tile_cap = min(MAX_TILE_ROWS, by_vmem)
    num_tiles = pl.cdiv(rows_needed, tile_cap)
    # Guarantee >= 2 grid steps so the "parallel" batch axis shards across both
    # v7x TensorCores; negligible cost on 1-TC v5e/v6e.
    if num_tiles == 1 and rows_needed >= 16:
        num_tiles = 2
    if num_tiles == 1:
        tm = rows_needed                                     # full-dim block, no row pad
    else:
        tm = _round_up(pl.cdiv(rows_needed, num_tiles), 8)
        num_tiles = pl.cdiv(rows_needed, tm)
    return tm, num_tiles


def koopman_forward(states, actions, ws, wa, pack, n_pad, *, return_packed=False):
    """states:(batch, n) f32, actions:(batch, d) f32; ws/wa from build_fused_weights.

    Returns (batch, n) f32.  With return_packed=True, returns the lane-dense
    (rows, pack*n_pad) slab instead (skips the 128->n output relayout; useful
    when the consumer is another packed step)."""
    batch, n = states.shape
    d = actions.shape[1]
    assert ws.shape == (pack * n, pack * n_pad)
    assert wa.shape == (pack * d, pack * n_pad)

    k_s = pack * n
    k_a = pack * d
    out_w = pack * n_pad

    rows_needed = pl.cdiv(batch, pack)
    bytes_per_row = 4 * (k_s + k_a + out_w)
    vmem_cap = _vmem_capacity_bytes()
    tm, num_tiles = _choose_tiles(rows_needed, bytes_per_row, vmem_cap)
    rows_padded = num_tiles * tm
    batch_padded = rows_padded * pack

    s = states.astype(jnp.float32)
    a = actions.astype(jnp.float32)
    if batch_padded != batch:
        # Only fires for ragged batches; zero rows give zero outputs, sliced off.
        s = jnp.pad(s, ((0, batch_padded - batch), (0, 0)))
        a = jnp.pad(a, ((0, batch_padded - batch), (0, 0)))
    # Copy-free row-major reshapes: no concat, no extra HBM pass over activations.
    s_packed = s.reshape(rows_padded, k_s)
    a_packed = a.reshape(rows_padded, k_a)

    stream_bytes = 2 * tm * bytes_per_row                    # double-buffered tiles
    weight_bytes = 2 * 4 * (int(ws.size) + int(wa.size))
    vmem_limit = int(min(stream_bytes + weight_bytes + (8 << 20),
                         vmem_cap * 7 // 10))
    vmem_limit = max(vmem_limit, 16 << 20)

    out_packed = pl.pallas_call(
        _koopman_kernel,
        out_shape=jax.ShapeDtypeStruct((rows_padded, out_w), jnp.float32),
        grid=(num_tiles,),
        in_specs=[
            pl.BlockSpec((tm, k_s), lambda i: (i, 0)),       # states: streamed
            pl.BlockSpec((tm, k_a), lambda i: (i, 0)),       # actions: streamed
            pl.BlockSpec((k_s, out_w), lambda i: (0, 0)),    # W_s: VMEM-resident
            pl.BlockSpec((k_a, out_w), lambda i: (0, 0)),    # W_a: VMEM-resident
        ],
        out_specs=pl.BlockSpec((tm, out_w), lambda i: (i, 0)),
        compiler_params=pltpu.CompilerParams(
            dimension_semantics=("parallel",),
            vmem_limit_bytes=vmem_limit),
    )(s_packed, a_packed, ws, wa)

    if return_packed:
        return out_packed
    return unpack_output(out_packed, batch, n, pack, n_pad)


def unpack_output(out_packed, batch, n, pack, n_pad):
    """Layout plumbing only: 128-lane packed rows back to (batch, n)."""
    rows = out_packed.shape[0]
    return out_packed.reshape(rows * pack, n_pad)[:batch, :n]


# ---------------------------------------------------------------------------
# Deterministic parameter init mirroring KoopamnOperator._initialize_A_B
# (host-side numpy; only the forward pass runs as a Pallas kernel).
# ---------------------------------------------------------------------------
def init_A_B(n, d, mean=0.0, std=0.1, seed=SEED):
    rng = np.random.default_rng(seed)
    A_init = (mean + std * rng.standard_normal((n, n))).astype(np.float32)
    U, S, Vt = np.linalg.svd(A_init, full_matrices=False)
    A = U @ np.diag(np.ones_like(S)) @ Vt          # force all singular values to 1
    B_init = (mean + std * rng.standard_normal((n, d))).astype(np.float32)
    U_B, S_B, Vt_B = np.linalg.svd(B_init, full_matrices=False)
    S_B = S_B.copy()
    S_B[min(n, d):] = 0.0                          # no-op when d <= n
    B = U_B @ np.diag(S_B) @ Vt_B
    return jnp.asarray(A, jnp.float32), jnp.asarray(B, jnp.float32)


def reference_forward(states, actions, A, B):
    return states + TAU * states @ A.T + actions @ B.T


# TODO(synk): regularize_largest_eigenvalue / loss_function (eigvals, MSE) have
# no clean Pallas equivalent here; only the forward pass is a kernel.


if __name__ == "__main__":
    batch, state_dim, action_dim = 8, 32, 8

    A, B = init_A_B(state_dim, action_dim)

    # Fused, lane-packed weights are built once, outside the hot path.
    W_s, W_a, pack, n_pad = build_fused_weights(A, B, TAU)

    key = jax.random.PRNGKey(0)
    ks, ka = jax.random.split(key)
    states = jax.random.normal(ks, (batch, state_dim), dtype=jnp.float32)
    actions = jax.random.normal(ka, (batch, action_dim), dtype=jnp.float32)

    out = koopman_forward(states, actions, W_s, W_a, pack, n_pad)
    out = jax.block_until_ready(out)

    ref = reference_forward(states, actions, A, B)
    assert out.shape == (batch, state_dim)
    assert jnp.allclose(out, ref, atol=1e-5, rtol=1e-5), "mismatch vs reference"

    print("KERNEL_OK")
</pallas_src>

<mosaic_0001>
module attributes {stable_mosaic.version = 11 : i64} {
  func.func @_koopman_kernel(%arg0: i32, %arg1: memref<2x128xf32, #tpu.memory_space<vmem>>, %arg2: memref<2x32xf32, #tpu.memory_space<vmem>>, %arg3: memref<128x128xf32, #tpu.memory_space<vmem>>, %arg4: memref<32x128xf32, #tpu.memory_space<vmem>>, %arg5: memref<2x128xf32, #tpu.memory_space<vmem>>) attributes {dimension_semantics = [#tpu.dimension_semantics<parallel>], iteration_bounds = array<i64: 1>, scalar_prefetch = 0 : i64, scratch_operands = 0 : i64, tpu.core_type = #tpu.core_type<tc>, window_params = [{transform_indices = @transform_0, window_bounds = array<i64: 2, 128>}, {transform_indices = @transform_1, window_bounds = array<i64: 2, 32>}, {pipeline_mode = #tpu.pipeline_mode<synchronous>, transform_indices = @transform_2, window_bounds = array<i64: 128, 128>}, {pipeline_mode = #tpu.pipeline_mode<synchronous>, transform_indices = @transform_3, window_bounds = array<i64: 32, 128>}, {transform_indices = @transform_4, window_bounds = array<i64: 2, 128>}]} {
    %c0 = arith.constant 0 : index
    %c0_0 = arith.constant 0 : index
    %0 = vector.load %arg1[%c0, %c0_0] : memref<2x128xf32, #tpu.memory_space<vmem>>, vector<2x128xf32>
    %c0_1 = arith.constant 0 : index
    %c0_2 = arith.constant 0 : index
    %1 = vector.load %arg3[%c0_1, %c0_2] : memref<128x128xf32, #tpu.memory_space<vmem>>, vector<128x128xf32>
    %cst = arith.constant dense<0.000000e+00> : vector<2x128xf32>
    %2 = tpu.matmul %0, %1, %cst {dimension_numbers = #tpu.dot_dimension_numbers<[1], [0], [0], [1], [0, 0, 1, 1], [], []>} : vector<2x128xf32>, vector<128x128xf32>, vector<2x128xf32> -> vector<2x128xf32>
    %c0_3 = arith.constant 0 : index
    %c0_4 = arith.constant 0 : index
    %3 = vector.load %arg2[%c0_3, %c0_4] : memref<2x32xf32, #tpu.memory_space<vmem>>, vector<2x32xf32>
    %c0_5 = arith.constant 0 : index
    %c0_6 = arith.constant 0 : index
    %4 = vector.load %arg4[%c0_5, %c0_6] : memref<32x128xf32, #tpu.memory_space<vmem>>, vector<32x128xf32>
    %cst_7 = arith.constant dense<0.000000e+00> : vector<2x128xf32>
    %5 = tpu.matmul %3, %4, %cst_7 {dimension_numbers = #tpu.dot_dimension_numbers<[1], [0], [0], [1], [0, 0, 1, 1], [], []>} : vector<2x32xf32>, vector<32x128xf32>, vector<2x128xf32> -> vector<2x128xf32>
    %6 = arith.addf %2, %5 : vector<2x128xf32>
    %c0_8 = arith.constant 0 : index
    %c0_9 = arith.constant 0 : index
    %7 = vector.load %arg5[%c0_8, %c0_9] : memref<2x128xf32, #tpu.memory_space<vmem>>, vector<2x128xf32>
    tpu.vector_store %arg5[%c0_8, %c0_9], %6 {strides = array<i32>} : memref<2x128xf32, #tpu.memory_space<vmem>>, vector<2x128xf32>,
    return
  }
  func.func @transform_0(%arg0: i32) -> (i32, i32) {
    %c0_i32 = arith.constant 0 : i32
    %c0_i32_0 = arith.constant 0 : i32
    return %arg0, %c0_i32 : i32, i32
  }
  func.func @transform_1(%arg0: i32) -> (i32, i32) {
    %c0_i32 = arith.constant 0 : i32
    %c0_i32_0 = arith.constant 0 : i32
    return %arg0, %c0_i32 : i32, i32
  }
  func.func @transform_2(%arg0: i32) -> (i32, i32) {
    %c0_i32 = arith.constant 0 : i32
    %c0_i32_0 = arith.constant 0 : i32
    %c0_i32_1 = arith.constant 0 : i32
    return %c0_i32, %c0_i32_0 : i32, i32
  }
  func.func @transform_3(%arg0: i32) -> (i32, i32) {
    %c0_i32 = arith.constant 0 : i32
    %c0_i32_0 = arith.constant 0 : i32
    %c0_i32_1 = arith.constant 0 : i32
    return %c0_i32, %c0_i32_0 : i32, i32
  }
  func.func @transform_4(%arg0: i32) -> (i32, i32) {
    %c0_i32 = arith.constant 0 : i32
    %c0_i32_0 = arith.constant 0 : i32
    return %arg0, %c0_i32 : i32, i32
  }
}

</mosaic_0001>

<llo_original>
// kernel: tpu_custom_call.1
$region0: #{tpu_custom_call.1}
  #allocation0 [shape = 'u32[]', space=smem, size = 0x4, offset = 0x4, fixed_abs, tag = 'smem constant byte address 0x4 - core index']
  #allocation1 [shape = 'u32[144,128]{1,0:T(1,128)}', space=vmem, size = 0x12000, scoped, tag = 'internal scratch']
  %s0 = inlined_call_operand.hbm [shape: f32[2,128], index: 0, kind: input, shape index: {}]
  %s1 = inlined_call_operand.vmem [shape: f32[2,32], index: 1, kind: input, shape index: {}]
  %s2 = inlined_call_operand.hbm [shape: f32[128,128], index: 2, kind: input, shape index: {}]
  %s3 = inlined_call_operand.hbm [shape: f32[32,128], index: 3, kind: input, shape index: {}]
  %s4 = inlined_call_operand.hbm [shape: f32[2,128], index: 4, kind: output, shape index: {}]
  %s5 = sld [smem:[#allocation0]]
  $region38: #{tpu_custom_call.1} parent=0
    _
  %s7 = ssub.s32 1, %s5
  %s8 = scalar_select 0, %s7, %s5
  $region1: #{tpu_custom_call.1} parent=0
    #allocation2 [shape = 'u8[1024]{0}', space=vmem, size = 0x400, scoped, tag = 'input window, operand 0, single buffered']
    #allocation3 [shape = 's32[1]{0}', space=sflag, size = 0x4, scoped, tag = 'scoped memory for tpu_custom_call.1']
    #allocation4 [shape = 's32[1]{0}', space=sflag, size = 0x4, scoped, tag = 'scoped memory for tpu_custom_call.1']
    #allocation5 [shape = 'u8[65536]{0}', space=vmem, size = 0x10000, scoped, tag = 'input window, operand 2, single buffered']
    #allocation6 [shape = 's32[1]{0}', space=sflag, size = 0x4, scoped, tag = 'scoped memory for tpu_custom_call.1']
    #allocation7 [shape = 'u8[16384]{0}', space=vmem, size = 0x4000, scoped, tag = 'input window, operand 3, single buffered']
    #allocation8 [shape = 'u8[1024]{0}', space=vmem, size = 0x400, scoped, tag = 'output window, operand 0, single buffered']
    %9 = vsyncpa [#allocation3], 0
    %10 = vsyncpa [#allocation6], 0
    %11 = vsyncpa [#allocation4], 0
    // Predicated region
    $region2: #{tpu_custom_call.1} parent=1 // pred_check
      _
    $region3: #{tpu_custom_call.1} parent=1 // pred_check_branch
      %13 = sbr.rel (0) target = $region5
    $region4: #{tpu_custom_call.1} parent=1 // pred_region
      %s15 = ssub.s32 32, 32
      %16 = vsyncadd [#allocation3], %s15
      %s18 = sshll.u32 [#allocation2], 4
      %s19 = int_to_ptr.vmem [resolvable:$true] %s18
      %21 = dma.hbm_to_vmem [thread:$0]  %s0, 32, %s19, [#allocation3]
    $region5: #{tpu_custom_call.1} parent=1 // pred_fallthru
      _
    // Predicated region
    $region6: #{tpu_custom_call.1} parent=1 // pred_check
      _
    $region7: #{tpu_custom_call.1} parent=1 // pred_check_branch
      %23 = sbr.rel (0) target = $region9
    $region8: #{tpu_custom_call.1} parent=1 // pred_region
      _
    $region9: #{tpu_custom_call.1} parent=1 // pred_fallthru
      _
    // Predicated region
    $region10: #{tpu_custom_call.1} parent=1 // pred_check
      _
    $region11: #{tpu_custom_call.1} parent=1 // pred_check_branch
      %25 = sbr.rel (0) target = $region13
    $region12: #{tpu_custom_call.1} parent=1 // pred_region
      %s27 = ssub.s32 2048, 2048
      %28 = vsyncadd [#allocation6], %s27
      %s29 = sshll.u32 [#allocation5], 4
      %s30 = int_to_ptr.vmem [resolvable:$true] %s29
      %35 = dma.hbm_to_vmem [thread:$0]  %s2, 2048, %s30, [#allocation6], 128, 128, 8
    $region13: #{tpu_custom_call.1} parent=1 // pred_fallthru
      _
    // Predicated region
    $region14: #{tpu_custom_call.1} parent=1 // pred_check
      _
    $region15: #{tpu_custom_call.1} parent=1 // pred_check_branch
      %37 = sbr.rel (0) target = $region17
    $region16: #{tpu_custom_call.1} parent=1 // pred_region
      %s39 = ssub.s32 512, 512
      %40 = vsyncadd [#allocation6], %s39
      %s41 = sshll.u32 [#allocation7], 4
      %s42 = int_to_ptr.vmem [resolvable:$true] %s41
      %47 = dma.hbm_to_vmem [thread:$0]  %s3, 512, %s42, [#allocation6], 128, 128, 8
    $region17: #{tpu_custom_call.1} parent=1 // pred_fallthru
      _
    // Predicated region
    $region18: #{tpu_custom_call.1} parent=1 // pred_check
      _
    $region19: #{tpu_custom_call.1} parent=1 // pred_check_branch
      %49 = sbr.rel (0) target = $region21
    $region20: #{tpu_custom_call.1} parent=1 // pred_region
      %50 = dma.done [#allocation3], 32
    $region21: #{tpu_custom_call.1} parent=1 // pred_fallthru
      _
    // Predicated region
    $region22: #{tpu_custom_call.1} parent=1 // pred_check
      _
    $region23: #{tpu_custom_call.1} parent=1 // pred_check_branch
      %52 = sbr.rel (0) target = $region25
    $region24: #{tpu_custom_call.1} parent=1 // pred_region
      %53 = dma.done [#allocation6], 2048
    $region25: #{tpu_custom_call.1} parent=1 // pred_fallthru
      _
    // Predicated region
    $region26: #{tpu_custom_call.1} parent=1 // pred_check
      _
    $region27: #{tpu_custom_call.1} parent=1 // pred_check_branch
      %55 = sbr.rel (0) target = $region29
    $region28: #{tpu_custom_call.1} parent=1 // pred_region
      %56 = dma.done [#allocation6], 512
    $region29: #{tpu_custom_call.1} parent=1 // pred_fallthru
      _
    %v57 = vld [vmem:[#allocation2] sm:$0x3]
    %v58 = vld [vmem:[#allocation5] sm:$0xff]
    %v59 = vld [vmem:[#allocation5 + $0x8] sm:$0xff]
    %v60 = vld [vmem:[#allocation5 + $0x10] sm:$0xff]
    %v61 = vld [vmem:[#allocation5 + $0x18] sm:$0xff]
    %v62 = vld [vmem:[#allocation5 + $0x20] sm:$0xff]
    %v63 = vld [vmem:[#allocation5 + $0x28] sm:$0xff]
    %v64 = vld [vmem:[#allocation5 + $0x30] sm:$0xff]
    %v65 = vld [vmem:[#allocation5 + $0x38] sm:$0xff]
    %v66 = vld [vmem:[#allocation5 + $0x40] sm:$0xff]
    %v67 = vld [vmem:[#allocation5 + $0x48] sm:$0xff]
    %v68 = vld [vmem:[#allocation5 + $0x50] sm:$0xff]
    %v69 = vld [vmem:[#allocation5 + $0x58] sm:$0xff]
    %v70 = vld [vmem:[#allocation5 + $0x60] sm:$0xff]
    %v71 = vld [vmem:[#allocation5 + $0x68] sm:$0xff]
    %v72 = vld [vmem:[#allocation5 + $0x70] sm:$0xff]
    %v73 = vld [vmem:[#allocation5 + $0x78] sm:$0xff]
    %v74 = vld [vmem:[%s1] sm:$0x3]
    %v75 = vld [vmem:[#allocation7] sm:$0xff]
    %v76 = vld [vmem:[#allocation7 + $0x8] sm:$0xff]
    %v77 = vld [vmem:[#allocation7 + $0x10] sm:$0xff]
    %v78 = vld [vmem:[#allocation7 + $0x18] sm:$0xff]
    %vm79 = vcmask 261120
    %v81 = vsel %vm79, %v74, 0
    %83 = vmatprep.subr.mxu0 0.0
    %84 = vmatpush1.msra.mxu0 %v75
    %85 = vmatprep.subr.mxu0 0.0
    %86 = vmatpush1.msra.mxu0 %v76
    %87 = vmatprep.subr.mxu0 0.0
    %88 = vmatpush1.msra.mxu0 %v77
    %89 = vmatprep.subr.mxu0 0.0
    %90 = vmatpush1.msra.mxu0 %v78
    %91 = vmatprep.subr.mxu0 0.0
    %92 = vmatpush1.msra.mxu0 0.0
    %93 = vmatprep.subr.mxu0 0.0
    %94 = vmatpush1.msra.mxu0 0.0
    %95 = vmatprep.subr.mxu0 0.0
    %96 = vmatpush1.msra.mxu0 0.0
    %97 = vmatprep.subr.mxu0 0.0
    %98 = vmatpush1.msra.mxu0 0.0
    %99 = vmatprep.subr.mxu0 0.0
    %100 = vmatpush1.msra.mxu0 0.0
    %101 = vmatprep.subr.mxu0 0.0
    %102 = vmatpush1.msra.mxu0 0.0
    %103 = vmatprep.subr.mxu0 0.0
    %104 = vmatpush1.msra.mxu0 0.0
    %105 = vmatprep.subr.mxu0 0.0
    %106 = vmatpush1.msra.mxu0 0.0
    %107 = vmatprep.subr.mxu0 0.0
    %108 = vmatpush1.msra.mxu0 0.0
    %109 = vmatprep.subr.mxu0 0.0
    %110 = vmatpush1.msra.mxu0 0.0
    %111 = vmatprep.subr.mxu0 0.0
    %112 = vmatpush1.msra.mxu0 0.0
    %113 = vmatprep.subr.mxu0 0.0
    %114 = vmatpush1.msra.mxu0 0.0
    %115 = vmatprep.subr.mxu0 0.0
    %116 = vmatpush1.msra.mxu0 0.0
    %117 = vmatprep.subr.mxu0 0.0
    %118 = vmatpush1.msra.mxu0 0.0
    %119 = vmatprep.subr.mxu0 0.0
    %120 = vmatpush1.msra.mxu0 0.0
    %121 = vmatprep.subr.mxu0 0.0
    %122 = vmatpush1.msra.mxu0 0.0
    %123 = vmatprep.subr.mxu0 0.0
    %124 = vmatpush1.msra.mxu0 0.0
    %125 = vmatprep.subr.mxu0 0.0
    %126 = vmatpush1.msra.mxu0 0.0
    %127 = vmatprep.subr.mxu0 0.0
    %128 = vmatpush1.msra.mxu0 0.0
    %129 = vmatprep.subr.mxu0 0.0
    %130 = vmatpush1.msra.mxu0 0.0
    %131 = vmatprep.subr.mxu0 0.0
    %132 = vmatpush1.msra.mxu0 0.0
    %133 = vmatprep.subr.mxu0 0.0
    %134 = vmatpush1.msra.mxu0 0.0
    %135 = vmatprep.subr.mxu0 0.0
    %136 = vmatpush1.msra.mxu0 0.0
    %137 = vmatprep.subr.mxu0 0.0
    %138 = vmatpush1.msra.mxu0 0.0
    %139 = vmatprep.subr.mxu0 0.0
    %140 = vmatpush1.msra.mxu0 0.0
    %141 = vmatprep.subr.mxu0 0.0
    %142 = vmatpush1.msra.mxu0 0.0
    %143 = vmatprep.subr.mxu0 0.0
    %144 = vmatpush1.msra.mxu0 0.0
    %145 = vmatprep.subr.mxu0 0.0
    %146 = vmatpush1.msra.mxu0 0.0
    %147 = vmatprep.mubr.f32.mxu0 0.0
    %148 = vmatmul.mubr.f32.gmra.mrb[0].mxu0 %v81
    %v149 = vpop.f32.mrb[0].mxu0
    %v150 = vadd.f32 0.0, %v149
    %v151 = vpop.f32.mrb[0].mxu0
    %152 = vdwg.mxu0
    %153 = vmatprep.subr.mxu0 0.0
    %154 = vmatpush1.msra.mxu0 %v58
    %155 = vmatprep.subr.mxu0 0.0
    %156 = vmatpush1.msra.mxu0 %v59
    %157 = vmatprep.subr.mxu0 0.0
    %158 = vmatpush1.msra.mxu0 %v60
    %159 = vmatprep.subr.mxu0 0.0
    %160 = vmatpush1.msra.mxu0 %v61
    %161 = vmatprep.subr.mxu0 0.0
    %162 = vmatpush1.msra.mxu0 %v62
    %163 = vmatprep.subr.mxu0 0.0
    %164 = vmatpush1.msra.mxu0 %v63
    %165 = vmatprep.subr.mxu0 0.0
    %166 = vmatpush1.msra.mxu0 %v64
    %167 = vmatprep.subr.mxu0 0.0
    %168 = vmatpush1.msra.mxu0 %v65
    %169 = vmatprep.subr.mxu0 0.0
    %170 = vmatpush1.msra.mxu0 %v66
    %171 = vmatprep.subr.mxu0 0.0
    %172 = vmatpush1.msra.mxu0 %v67
    %173 = vmatprep.subr.mxu0 0.0
    %174 = vmatpush1.msra.mxu0 %v68
    %175 = vmatprep.subr.mxu0 0.0
    %176 = vmatpush1.msra.mxu0 %v69
    %177 = vmatprep.subr.mxu0 0.0
    %178 = vmatpush1.msra.mxu0 %v70
    %179 = vmatprep.subr.mxu0 0.0
    %180 = vmatpush1.msra.mxu0 %v71
    %181 = vmatprep.subr.mxu0 0.0
    %182 = vmatpush1.msra.mxu0 %v72
    %183 = vmatprep.subr.mxu0 0.0
    %184 = vmatpush1.msra.mxu0 %v73
    %185 = vmatprep.subr.mxu0 0.0
    %186 = vmatpush1.msra.mxu0 0.0
    %187 = vmatprep.subr.mxu0 0.0
    %188 = vmatpush1.msra.mxu0 0.0
    %189 = vmatprep.subr.mxu0 0.0
    %190 = vmatpush1.msra.mxu0 0.0
    %191 = vmatprep.subr.mxu0 0.0
    %192 = vmatpush1.msra.mxu0 0.0
    %193 = vmatprep.subr.mxu0 0.0
    %194 = vmatpush1.msra.mxu0 0.0
    %195 = vmatprep.subr.mxu0 0.0
    %196 = vmatpush1.msra.mxu0 0.0
    %197 = vmatprep.subr.mxu0 0.0
    %198 = vmatpush1.msra.mxu0 0.0
    %199 = vmatprep.subr.mxu0 0.0
    %200 = vmatpush1.msra.mxu0 0.0
    %201 = vmatprep.subr.mxu0 0.0
    %202 = vmatpush1.msra.mxu0 0.0
    %203 = vmatprep.subr.mxu0 0.0
    %204 = vmatpush1.msra.mxu0 0.0
    %205 = vmatprep.subr.mxu0 0.0
    %206 = vmatpush1.msra.mxu0 0.0
    %207 = vmatprep.subr.mxu0 0.0
    %208 = vmatpush1.msra.mxu0 0.0
    %209 = vmatprep.subr.mxu0 0.0
    %210 = vmatpush1.msra.mxu0 0.0
    %211 = vmatprep.subr.mxu0 0.0
    %212 = vmatpush1.msra.mxu0 0.0
    %213 = vmatprep.subr.mxu0 0.0
    %214 = vmatpush1.msra.mxu0 0.0
    %215 = vmatprep.subr.mxu0 0.0
    %216 = vmatpush1.msra.mxu0 0.0
    %217 = vmatprep.mubr.f32.mxu0 0.0
    %218 = vmatmul.mubr.f32.gmra.mrb[0].mxu0 %v57
    %v219 = vpop.f32.mrb[0].mxu0
    %v220 = vadd.f32 %v150, %v219
    %v221 = vpop.f32.mrb[0].mxu0
    %222 = vdwg.mxu0
    %223 = vst [vmem:[#allocation8] sm:$0x3] %v220
    // Predicated region
    $region30: #{tpu_custom_call.1} parent=1 // pred_check
      _
    $region31: #{tpu_custom_call.1} parent=1 // pred_check_branch
      %225 = sbr.rel (0) target = $region33
    $region32: #{tpu_custom_call.1} parent=1 // pred_region
      %s227 = ssub.s32 32, 32
      %228 = vsyncadd [#allocation4], %s227
      %s230 = sshll.u32 [#allocation8], 4
      %s231 = int_to_ptr.vmem [resolvable:$true] %s230
      %233 = dma.vmem_to_hbm [thread:$0]  %s231, 32, %s4, [#allocation4]
    $region33: #{tpu_custom_call.1} parent=1 // pred_fallthru
      _
    // Predicated region
    $region34: #{tpu_custom_call.1} parent=1 // pred_check
      _
    $region35: #{tpu_custom_call.1} parent=1 // pred_check_branch
      %235 = sbr.rel (0) target = $region37
    $region36: #{tpu_custom_call.1} parent=1 // pred_region
      %236 = dma.done [#allocation4], 32
    $region37: #{tpu_custom_call.1} parent=1 // pred_fallthru
      _
    %237 = vsyncpa [#allocation3], 1
    %238 = vsyncpa [#allocation6], 1
    %239 = vsyncpa [#allocation4], 1

</llo_original>
